<compile_context>
chip_gen: v7x
topology: tpu7x:2x2x1
jax: 0.10.0
libtpu: 0.0.40
codegen_flags: <defaults>
</compile_context>

<pallas_src>
import functools

import jax
import jax.numpy as jnp
from jax import lax
from jax.experimental import pallas as pl
from jax.experimental.pallas import tpu as pltpu


def _prophetnet_loss_kernel(x_ref, t_ref, m_ref, o_ref, *, native_compute):
    # x_ref: (1, 1, seq_tile, num_class)  logits slab for one (batch, ngram)
    # t_ref: (1, seq_tile, 1)  int32 target class ids (seq on sublanes)
    # m_ref: (1, seq_tile, 1)  float32 mask
    # o_ref: (1, 1, 1, 1)      float32 masked-CE partial sum (resident accumulator)
    s = pl.program_id(2)

    @pl.when(s == 0)
    def _():
        o_ref[...] = jnp.zeros_like(o_ref)

    seq_tile, num_class = x_ref.shape[2], x_ref.shape[3]

    xg = x_ref[0, 0]                              # (seq_tile, num_class), native dtype
    if not native_compute:
        # Exotic dtypes (fp16/fp8/...) -> widen once up front.
        xg = xg.astype(jnp.float32)
    t2 = t_ref[0]                                 # (seq_tile, 1) int32
    m2 = m_ref[0].astype(jnp.float32)             # (seq_tile, 1)

    # Fused pass: row max + one-hot target select in the native dtype (exact:
    # exactly one element survives the select per row), then a single f32
    # convert feeding the shifted exp-sum.
    class_ids = lax.broadcasted_iota(jnp.int32, (seq_tile, num_class), 1)
    x_max = jnp.max(xg, axis=-1, keepdims=True)                       # (seq_tile, 1)
    tgt = jnp.sum(jnp.where(class_ids == t2, xg, 0),
                  axis=-1, keepdims=True)                             # (seq_tile, 1)

    x_max32 = x_max.astype(jnp.float32)
    xs = xg.astype(jnp.float32) - x_max32                             # f32 subtract
    sum_ex = jnp.sum(jnp.exp(xs), axis=-1, keepdims=True)             # f32, EUP exp

    ce = x_max32 + jnp.log(sum_ex) - tgt.astype(jnp.float32)          # (seq_tile, 1)
    acc = jnp.sum(ce * m2, keepdims=True)                             # (1, 1)
    o_ref[...] += acc.reshape(1, 1, 1, 1)


def _vmem_budgets():
    """(per_grid_step_budget_bytes, vmem_limit_bytes), generation-aware."""
    cap = None
    try:
        cap = int(pltpu.get_tpu_info().vmem_capacity_bytes)
    except Exception:
        cap = None
    if cap is None:
        cap = 64 * 1024 * 1024                      # conservative: v7x per-TC VMEM
    if cap >= 100 * 1024 * 1024:                    # v5e / v6e: 128 MiB physical
        return 48 * 1024 * 1024, 64 * 1024 * 1024
    return 32 * 1024 * 1024, 48 * 1024 * 1024       # v7x: 64 MiB per TensorCore


def _choose_seq_tiling(seq_len, num_class, itemsize, budget_bytes, sublane):
    """Pick a seq tile so one grid step's VMEM footprint stays under budget.

    Per step:  2 * tile * C * itemsize   (double-buffered logits stream)
             + 2 * tile * C * 4          (f32 intermediates: shifted slab / exp)
    """
    per_row = num_class * (2 * itemsize + 2 * 4)
    if seq_len * per_row <= budget_bytes:
        # whole sequence fits: single block per (batch, ngram), no padding
        return seq_len, seq_len
    tile = (budget_bytes // per_row) // sublane * sublane
    tile = max(sublane, tile)
    seq_pad = ((seq_len + tile - 1) // tile) * tile
    return tile, seq_pad


def prophetnet_loss(logits, target, masks=None, sample_weight=None,
                    reduction="mean", seq_tile_budget_bytes=None):
    """JAX/Pallas equivalent of ProphetnetLoss.forward."""
    assert logits.ndim == 4 and target.ndim == 2
    batch, ngram, seq_len, num_class = logits.shape

    if masks is None:
        masks = jnp.ones((batch, seq_len), dtype=jnp.float32)
    masks = masks.astype(jnp.float32)
    target = target.astype(jnp.int32)

    itemsize = jnp.dtype(logits.dtype).itemsize
    per_step_budget, vmem_limit = _vmem_budgets()
    if seq_tile_budget_bytes is not None:
        per_step_budget = seq_tile_budget_bytes
    sublane = max(8, 32 // itemsize)                # f32: 8, bf16: 16, int8/fp8: 32
    seq_tile, seq_pad = _choose_seq_tiling(
        seq_len, num_class, itemsize, per_step_budget, sublane)

    if seq_pad != seq_len:
        pad = seq_pad - seq_len
        logits_k = jnp.pad(logits, ((0, 0), (0, 0), (0, pad), (0, 0)))  # finite pad
        target_k = jnp.pad(target, ((0, 0), (0, pad)))                  # class 0: valid id
        masks_k = jnp.pad(masks, ((0, 0), (0, pad)))                    # mask 0: no contribution
    else:
        logits_k, target_k, masks_k = logits, target, masks

    # seq on the sublane axis for target/mask (lane dim 1 == full dim -> legal tile,
    # no lane->sublane relayout for the one-hot compare).
    t3 = target_k.reshape(batch, seq_pad, 1)
    m3 = masks_k.reshape(batch, seq_pad, 1)

    n_seq_tiles = seq_pad // seq_tile
    native_compute = logits.dtype in (jnp.dtype(jnp.float32), jnp.dtype(jnp.bfloat16))
    kernel = functools.partial(_prophetnet_loss_kernel,
                               native_compute=native_compute)

    part = pl.pallas_call(
        kernel,
        out_shape=jax.ShapeDtypeStruct((batch, ngram, 1, 1), jnp.float32),
        grid_spec=pltpu.PrefetchScalarGridSpec(
            num_scalar_prefetch=0,
            grid=(batch, ngram, n_seq_tiles),
            in_specs=[
                pl.BlockSpec((1, 1, seq_tile, num_class),
                             lambda b, g, s: (b, g, s, 0)),
                pl.BlockSpec((1, seq_tile, 1), lambda b, g, s: (b, s, 0)),
                pl.BlockSpec((1, seq_tile, 1), lambda b, g, s: (b, s, 0)),
            ],
            out_specs=pl.BlockSpec((1, 1, 1, 1), lambda b, g, s: (b, g, 0, 0)),
        ),
        compiler_params=pltpu.CompilerParams(
            dimension_semantics=("parallel", "parallel", "arbitrary"),
            vmem_limit_bytes=vmem_limit,
        ),
    )(logits_k, t3, m3)

    # cheap per-sample glue in plain JAX: ngram-sum, denominator, weighting, reduction
    loss_sum = jnp.sum(part.reshape(batch, ngram), axis=1)            # (batch,)
    mask_sum = float(ngram) * jnp.sum(masks, axis=1)                  # (batch,)
    loss = loss_sum / jnp.maximum(mask_sum, 1.0)
    if sample_weight is not None:
        loss = loss * sample_weight.astype(jnp.float32)
    if reduction == "mean":
        loss = jnp.mean(loss)
    return loss


def _reference_loss(logits, target, masks, sample_weight, reduction="mean"):
    """Pure-JAX reference replicating the PyTorch module for verification."""
    batch, ngram, seq, num_class = logits.shape
    logp = jax.nn.log_softmax(logits.astype(jnp.float32), axis=-1)
    tgt = jnp.broadcast_to(target[:, None, :], (batch, ngram, seq))
    ce = -jnp.take_along_axis(logp, tgt[..., None].astype(jnp.int32), axis=-1)[..., 0]
    m = jnp.broadcast_to(masks[:, None, :].astype(jnp.float32), (batch, ngram, seq))
    num = jnp.sum(ce * m, axis=(1, 2))
    den = jnp.maximum(jnp.sum(m, axis=(1, 2)), 1.0)
    loss = num / den * sample_weight.astype(jnp.float32)
    if reduction == "mean":
        return jnp.mean(loss)
    return loss


if __name__ == "__main__":
    # --- Config 1: small f32 shapes, single-block (untiled) path ---------------
    batch, ngram, seq, num_class = 2, 2, 8, 32
    k1, k2, k3, k4 = jax.random.split(jax.random.PRNGKey(0), 4)
    logits = jax.random.normal(k1, (batch, ngram, seq, num_class), dtype=jnp.float32)
    target = jax.random.randint(k2, (batch, seq), 0, num_class, dtype=jnp.int32)
    masks = jax.random.bernoulli(k3, 0.8, (batch, seq)).astype(jnp.float32)
    sample_weight = jax.random.uniform(k4, (batch,), minval=0.5, maxval=1.5,
                                       dtype=jnp.float32)

    out = prophetnet_loss(logits, target, masks=masks,
                          sample_weight=sample_weight, reduction="mean")
    out = jax.block_until_ready(out)
    ref = jax.block_until_ready(
        _reference_loss(logits, target, masks, sample_weight, reduction="mean"))
    assert jnp.allclose(out, ref, rtol=1e-5, atol=1e-5), (out, ref)

    # --- Config 2: f32, force the seq-tiled accumulator path (+ seq padding) ---
    b2, ng2, sq2, nc2 = 2, 2, 20, 128
    k5, k6, k7, k8 = jax.random.split(jax.random.PRNGKey(1), 4)
    logits2 = jax.random.normal(k5, (b2, ng2, sq2, nc2), dtype=jnp.float32)
    target2 = jax.random.randint(k6, (b2, sq2), 0, nc2, dtype=jnp.int32)
    masks2 = jax.random.bernoulli(k7, 0.8, (b2, sq2)).astype(jnp.float32)
    sw2 = jax.random.uniform(k8, (b2,), minval=0.5, maxval=1.5, dtype=jnp.float32)

    out2 = prophetnet_loss(logits2, target2, masks=masks2, sample_weight=sw2,
                           reduction="mean",
                           seq_tile_budget_bytes=8 * 1024)  # tiny budget -> seq_tile=8
    out2 = jax.block_until_ready(out2)
    ref2 = jax.block_until_ready(
        _reference_loss(logits2, target2, masks2, sw2, reduction="mean"))
    assert jnp.allclose(out2, ref2, rtol=1e-5, atol=1e-5), (out2, ref2)

    # --- Config 3: bf16 logits, tiled path (bf16 max/select, f32 exp-sum) ------
    b3, ng3, sq3, nc3 = 2, 3, 40, 256
    k9, k10, k11, k12 = jax.random.split(jax.random.PRNGKey(2), 4)
    logits3 = jax.random.normal(k9, (b3, ng3, sq3, nc3), dtype=jnp.float32)
    logits3 = logits3.astype(jnp.bfloat16)
    target3 = jax.random.randint(k10, (b3, sq3), 0, nc3, dtype=jnp.int32)
    masks3 = jax.random.bernoulli(k11, 0.8, (b3, sq3)).astype(jnp.float32)
    sw3 = jax.random.uniform(k12, (b3,), minval=0.5, maxval=1.5, dtype=jnp.float32)

    out3 = prophetnet_loss(logits3, target3, masks=masks3, sample_weight=sw3,
                           reduction="mean",
                           seq_tile_budget_bytes=16 * 1024)  # force seq_tile=16
    out3 = jax.block_until_ready(out3)
    ref3 = jax.block_until_ready(
        _reference_loss(logits3, target3, masks3, sw3, reduction="mean"))
    assert jnp.allclose(out3, ref3, rtol=1e-4, atol=1e-4), (out3, ref3)

    print("KERNEL_OK")
</pallas_src>

<mosaic_0001>
module attributes {stable_mosaic.version = 11 : i64} {
  func.func @_prophetnet_loss_kernel(%arg0: i32, %arg1: i32, %arg2: i32, %arg3: memref<1x1x8x32xf32, #tpu.memory_space<vmem>>, %arg4: memref<1x8x1xi32, #tpu.memory_space<vmem>>, %arg5: memref<1x8x1xf32, #tpu.memory_space<vmem>>, %arg6: memref<1x1x1x1xf32, #tpu.memory_space<vmem>>) attributes {dimension_semantics = [#tpu.dimension_semantics<parallel>, #tpu.dimension_semantics<parallel>, #tpu.dimension_semantics<arbitrary>], iteration_bounds = array<i64: 2, 2, 1>, scalar_prefetch = 0 : i64, scratch_operands = 0 : i64, tpu.core_type = #tpu.core_type<tc>, window_params = [{transform_indices = @transform_0, window_bounds = array<i64: 1, 1, 8, 32>}, {transform_indices = @transform_1, window_bounds = array<i64: 1, 8, 1>}, {transform_indices = @transform_2, window_bounds = array<i64: 1, 8, 1>}, {transform_indices = @transform_3, window_bounds = array<i64: 1, 1, 1, 1>}]} {
    %c0_i32 = arith.constant 0 : i32
    %0 = arith.cmpi eq, %arg2, %c0_i32 : i32
    %1 = arith.extui %0 : i1 to i32
    %c0_i32_0 = arith.constant 0 : i32
    %2 = arith.cmpi ne, %1, %c0_i32_0 : i32
    scf.if %2 {
      %cst_22 = arith.constant 0.000000e+00 : f32
      %37 = vector.broadcast %cst_22 : f32 to vector<1x1x1x1xf32>
      %c0_23 = arith.constant 0 : index
      %c0_24 = arith.constant 0 : index
      %c0_25 = arith.constant 0 : index
      %c0_26 = arith.constant 0 : index
      %38 = vector.load %arg6[%c0_23, %c0_24, %c0_25, %c0_26] : memref<1x1x1x1xf32, #tpu.memory_space<vmem>>, vector<1x1x1x1xf32>
      tpu.vector_store %arg6[%c0_23, %c0_24, %c0_25, %c0_26], %37 {strides = array<i32>} : memref<1x1x1x1xf32, #tpu.memory_space<vmem>>, vector<1x1x1x1xf32>,
    } else {
    }
    %c0 = arith.constant 0 : index
    %c0_1 = arith.constant 0 : index
    %c0_2 = arith.constant 0 : index
    %c0_3 = arith.constant 0 : index
    %3 = vector.load %arg3[%c0, %c0_1, %c0_2, %c0_3] : memref<1x1x8x32xf32, #tpu.memory_space<vmem>>, vector<1x1x8x32xf32>
    %4 = vector.shape_cast %3 : vector<1x1x8x32xf32> to vector<8x32xf32>
    %c0_4 = arith.constant 0 : index
    %c0_5 = arith.constant 0 : index
    %c0_6 = arith.constant 0 : index
    %5 = vector.load %arg4[%c0_4, %c0_5, %c0_6] : memref<1x8x1xi32, #tpu.memory_space<vmem>>, vector<1x8x1xi32>
    %6 = vector.shape_cast %5 : vector<1x8x1xi32> to vector<8x1xi32>
    %c0_7 = arith.constant 0 : index
    %c0_8 = arith.constant 0 : index
    %c0_9 = arith.constant 0 : index
    %7 = vector.load %arg5[%c0_7, %c0_8, %c0_9] : memref<1x8x1xf32, #tpu.memory_space<vmem>>, vector<1x8x1xf32>
    %8 = vector.shape_cast %7 : vector<1x8x1xf32> to vector<8x1xf32>
    %9 = tpu.iota {dimensions = array<i32: 1>} : vector<8x32xi32>
    %cst = arith.constant dense<0xFF800000> : vector<8xf32>
    %10 = vector.multi_reduction <maximumf>, %4, %cst [1] : vector<8x32xf32> to vector<8xf32>
    %11 = vector.shape_cast %10 : vector<8xf32> to vector<8x1xf32>
    %12 = vector.broadcast %6 : vector<8x1xi32> to vector<8x32xi32>
    %13 = arith.cmpi eq, %9, %12 : vector<8x32xi32>
    %c0_i32_10 = arith.constant 0 : i32
    %14 = arith.sitofp %c0_i32_10 : i32 to f32
    %15 = vector.broadcast %14 : f32 to vector<8x32xf32>
    %16 = arith.select %13, %4, %15 : vector<8x32xi1>, vector<8x32xf32>
    %cst_11 = arith.constant dense<0.000000e+00> : vector<8xf32>
    %17 = vector.multi_reduction <add>, %16, %cst_11 [1] : vector<8x32xf32> to vector<8xf32>
    %18 = vector.shape_cast %17 : vector<8xf32> to vector<8x1xf32>
    %19 = vector.broadcast %11 : vector<8x1xf32> to vector<8x32xf32>
    %20 = arith.subf %4, %19 : vector<8x32xf32>
    %21 = math.exp %20 : vector<8x32xf32>
    %cst_12 = arith.constant dense<0.000000e+00> : vector<8xf32>
    %22 = vector.multi_reduction <add>, %21, %cst_12 [1] : vector<8x32xf32> to vector<8xf32>
    %23 = vector.shape_cast %22 : vector<8xf32> to vector<8x1xf32>
    %24 = math.log %23 : vector<8x1xf32>
    %25 = arith.addf %11, %24 : vector<8x1xf32>
    %26 = arith.subf %25, %18 : vector<8x1xf32>
    %27 = arith.mulf %26, %8 : vector<8x1xf32>
    %28 = vector.shape_cast %27 : vector<8x1xf32> to vector<1x8x1xf32>
    %cst_13 = arith.constant dense<0.000000e+00> : vector<1xf32>
    %29 = vector.multi_reduction <add>, %28, %cst_13 [1, 2] : vector<1x8x1xf32> to vector<1xf32>
    %30 = vector.shape_cast %29 : vector<1xf32> to vector<1x1x1xf32>
    %31 = vector.extract %30[0, 0, 0] : f32 from vector<1x1x1xf32>
    %32 = vector.broadcast %31 : f32 to vector<1x1xf32>
    %c0_14 = arith.constant 0 : index
    %c0_15 = arith.constant 0 : index
    %c0_16 = arith.constant 0 : index
    %c0_17 = arith.constant 0 : index
    %33 = vector.load %arg6[%c0_14, %c0_15, %c0_16, %c0_17] : memref<1x1x1x1xf32, #tpu.memory_space<vmem>>, vector<1x1x1x1xf32>
    %34 = vector.shape_cast %32 : vector<1x1xf32> to vector<1x1x1x1xf32>
    %35 = arith.addf %33, %34 : vector<1x1x1x1xf32>
    %c0_18 = arith.constant 0 : index
    %c0_19 = arith.constant 0 : index
    %c0_20 = arith.constant 0 : index
    %c0_21 = arith.constant 0 : index
    %36 = vector.load %arg6[%c0_18, %c0_19, %c0_20, %c0_21] : memref<1x1x1x1xf32, #tpu.memory_space<vmem>>, vector<1x1x1x1xf32>
    tpu.vector_store %arg6[%c0_18, %c0_19, %c0_20, %c0_21], %35 {strides = array<i32>} : memref<1x1x1x1xf32, #tpu.memory_space<vmem>>, vector<1x1x1x1xf32>,
    return
  }
  func.func @transform_0(%arg0: i32, %arg1: i32, %arg2: i32) -> (i32, i32, i32, i32) {
    %c0_i32 = arith.constant 0 : i32
    %c0_i32_0 = arith.constant 0 : i32
    return %arg0, %arg1, %arg2, %c0_i32 : i32, i32, i32, i32
  }
  func.func @transform_1(%arg0: i32, %arg1: i32, %arg2: i32) -> (i32, i32, i32) {
    %c0_i32 = arith.constant 0 : i32
    %c0_i32_0 = arith.constant 0 : i32
    return %arg0, %arg2, %c0_i32 : i32, i32, i32
  }
  func.func @transform_2(%arg0: i32, %arg1: i32, %arg2: i32) -> (i32, i32, i32) {
    %c0_i32 = arith.constant 0 : i32
    %c0_i32_0 = arith.constant 0 : i32
    return %arg0, %arg2, %c0_i32 : i32, i32, i32
  }
  func.func @transform_3(%arg0: i32, %arg1: i32, %arg2: i32) -> (i32, i32, i32, i32) {
    %c0_i32 = arith.constant 0 : i32
    %c0_i32_0 = arith.constant 0 : i32
    %c0_i32_1 = arith.constant 0 : i32
    return %arg0, %arg1, %c0_i32, %c0_i32_0 : i32, i32, i32, i32
  }
}

</mosaic_0001>

<llo_original>
// kernel: tpu_custom_call.1
$region0: #{tpu_custom_call.1}
  #allocation0 [shape = 'u32[]', space=smem, size = 0x4, offset = 0x4, fixed_abs, tag = 'smem constant byte address 0x4 - core index']
  #allocation1 [shape = 'u32[144,128]{1,0:T(1,128)}', space=vmem, size = 0x12000, scoped, tag = 'internal scratch']
  %s0 = inlined_call_operand.vmem [shape: f32[2,2,8,32], index: 0, kind: input, shape index: {}]
  %s1 = inlined_call_operand.vmem [shape: s32[2,8,1], index: 1, kind: input, shape index: {}]
  %s2 = inlined_call_operand.vmem [shape: f32[2,8,1], index: 2, kind: input, shape index: {}]
  %s3 = inlined_call_operand.vmem [shape: f32[2,2,1,1], index: 3, kind: output, shape index: {}]
  %s4 = sld [smem:[#allocation0]]
  $region49: #{tpu_custom_call.1} parent=0
    _
  %s6 = ssub.s32 1, %s4
  %s7 = scalar_select 0, %s6, %s4
  loop: start=0, step=1, limit=6
  $region2: #{tpu_custom_call.1} parent=0 // loop_pre_header
    _
  $region3: #{tpu_custom_call.1} parent=0 // loop_header
    %s9 = sphi 0, %s13
    %p10 = scmp.ge.s32.totalorder %s9, 6
    %s16 = sphi 0, %s35
    %s17 = sphi 0, %s31
    %s18 = sphi 0, %s27
    %s19 = sphi 0, %s16
    %s20 = sphi 0, %s17
    %s21 = sphi 0, %s18
    %s22 = sphi 0, %s19
    %s23 = sphi 0, %s20
    %s24 = sphi 0, %s21
    %s42 = sphi 0, %s44
    %s45 = sphi 0, %s42
    %s46 = sphi 0, %s45
    %s62 = sphi 0, %s46
    %s70 = sphi 0, %s72
    %s73 = sphi 0, %s70
    %s74 = sphi 0, %s73
    %s90 = sphi 0, %s74
    %s98 = sphi 0, %s100
    %s101 = sphi 0, %s98
    %s102 = sphi 0, %s101
    %s118 = sphi 0, %s102
    %s126 = sphi 0, %s128
    %s129 = sphi 0, %s126
    %s130 = sphi 0, %s129
    %s146 = sphi 0, %s130
  $region4: #{tpu_custom_call.1} parent=0 // loop_header_branch
    %12 = sbr.rel (%p10) target = $region8
  $region5: #{tpu_custom_call.1} parent=0 // loop_body
    %s14 = ssub.s32 %s9, 1
    %s15 = ssub.s32 %s9, 2
    %s25 = sadd.s32 1, %s18
    %p26 = scmp.ge.s32.totalorder %s25, 1
    %s27 = scalar_select %p26, 0, %s25
    %s28 = sadd.s32 1, %s17
    %s29 = scalar_select %p26, %s28, %s17
    %p30 = scmp.ge.s32.totalorder %s29, 2
    %s31 = scalar_select %p30, 0, %s29
    %s32 = sadd.s32 1, %s16
    %s33 = scalar_select %p30, %s32, %s16
    %p34 = scmp.ge.s32.totalorder %s33, 2
    %s35 = scalar_select %p34, 0, %s33
    %s36 = ssub.s32 %s16, %s35
    %s37 = ssub.s32 %s17, %s31
    %s38 = sor.u32 %s36, %s37
    %s39 = ssub.s32 %s18, %s27
    %s40 = sor.u32 %s38, %s39
    %p41 = scmp.eq.s32.totalorder %s40, 0
    %s43 = sadd.s32 %s42, 1
    %s44 = scalar_select %p41, %s42, %s43
    %p47 = pneg %p41
    %p48 = scmp.eq.s32.totalorder %s9, 3
    %p49 = por %p47, %p48
    %p50 = scmp.ne.s32.totalorder %s42, %s45
    %p51 = scmp.eq.s32.totalorder %s9, 0
    %p52 = por %p50, %p51
    %p53 = scmp.ne.s32.totalorder %s42, %s45
    %p54 = scmp.eq.s32.totalorder %s14, 3
    %p55 = por %p53, %p54
    %p56 = scmp.ne.s32.totalorder %s45, %s46
    %p57 = scmp.eq.s32.totalorder %s14, 0
    %p58 = por %p56, %p57
    %p59 = scmp.ne.s32.totalorder %s45, %s46
    %p60 = scmp.eq.s32.totalorder %s15, 3
    %p61 = por %p59, %p60
    %p63 = scmp.ne.s32.totalorder %s46, %s62
    %p64 = scmp.eq.s32.totalorder %s15, 0
    %p65 = por %p63, %p64
    %s66 = ssub.s32 %s16, %s35
    %s67 = ssub.s32 %s18, %s27
    %s68 = sor.u32 %s66, %s67
    %p69 = scmp.eq.s32.totalorder %s68, 0
    %s71 = sadd.s32 %s70, 1
    %s72 = scalar_select %p69, %s70, %s71
    %p75 = pneg %p69
    %p76 = scmp.eq.s32.totalorder %s9, 3
    %p77 = por %p75, %p76
    %p78 = scmp.ne.s32.totalorder %s70, %s73
    %p79 = scmp.eq.s32.totalorder %s9, 0
    %p80 = por %p78, %p79
    %p81 = scmp.ne.s32.totalorder %s70, %s73
    %p82 = scmp.eq.s32.totalorder %s14, 3
    %p83 = por %p81, %p82
    %p84 = scmp.ne.s32.totalorder %s73, %s74
    %p85 = scmp.eq.s32.totalorder %s14, 0
    %p86 = por %p84, %p85
    %p87 = scmp.ne.s32.totalorder %s73, %s74
    %p88 = scmp.eq.s32.totalorder %s15, 3
    %p89 = por %p87, %p88
    %p91 = scmp.ne.s32.totalorder %s74, %s90
    %p92 = scmp.eq.s32.totalorder %s15, 0
    %p93 = por %p91, %p92
    %s94 = ssub.s32 %s16, %s35
    %s95 = ssub.s32 %s18, %s27
    %s96 = sor.u32 %s94, %s95
    %p97 = scmp.eq.s32.totalorder %s96, 0
    %s99 = sadd.s32 %s98, 1
    %s100 = scalar_select %p97, %s98, %s99
    %p103 = pneg %p97
    %p104 = scmp.eq.s32.totalorder %s9, 3
    %p105 = por %p103, %p104
    %p106 = scmp.ne.s32.totalorder %s98, %s101
    %p107 = scmp.eq.s32.totalorder %s9, 0
    %p108 = por %p106, %p107
    %p109 = scmp.ne.s32.totalorder %s98, %s101
    %p110 = scmp.eq.s32.totalorder %s14, 3
    %p111 = por %p109, %p110
    %p112 = scmp.ne.s32.totalorder %s101, %s102
    %p113 = scmp.eq.s32.totalorder %s14, 0
    %p114 = por %p112, %p113
    %p115 = scmp.ne.s32.totalorder %s101, %s102
    %p116 = scmp.eq.s32.totalorder %s15, 3
    %p117 = por %p115, %p116
    %p119 = scmp.ne.s32.totalorder %s102, %s118
    %p120 = scmp.eq.s32.totalorder %s15, 0
    %p121 = por %p119, %p120
    %s122 = ssub.s32 %s16, %s35
    %s123 = ssub.s32 %s17, %s31
    %s124 = sor.u32 %s122, %s123
    %p125 = scmp.eq.s32.totalorder %s124, 0
    %s127 = sadd.s32 %s126, 1
    %s128 = scalar_select %p125, %s126, %s127
    %p131 = pneg %p125
    %p132 = scmp.eq.s32.totalorder %s9, 3
    %p133 = por %p131, %p132
    %p134 = scmp.ne.s32.totalorder %s126, %s129
    %p135 = scmp.eq.s32.totalorder %s9, 0
    %p136 = por %p134, %p135
    %p137 = scmp.ne.s32.totalorder %s126, %s129
    %p138 = scmp.eq.s32.totalorder %s14, 3
    %p139 = por %p137, %p138
    %p140 = scmp.ne.s32.totalorder %s129, %s130
    %p141 = scmp.eq.s32.totalorder %s14, 0
    %p142 = por %p140, %p141
    %p143 = scmp.ne.s32.totalorder %s129, %s130
    %p144 = scmp.eq.s32.totalorder %s15, 3
    %p145 = por %p143, %p144
    %p147 = scmp.ne.s32.totalorder %s130, %s146
    %p148 = scmp.eq.s32.totalorder %s15, 0
    %p149 = por %p147, %p148
    %p150 = scmp.le.s32.totalorder 1, %s9
    %p151 = scmp.lt.s32.totalorder %s9, 5
    %p152 = pnand %p150, %p151
    %p153 = pneg %p152
    // Predicated region
    $region9: #{tpu_custom_call.1} parent=5 // pred_check
      _
    $region10: #{tpu_custom_call.1} parent=5 // pred_check_branch
      %155 = sbr.rel (%p152) target = $region12
    $region11: #{tpu_custom_call.1} parent=5 // pred_region
      %s156 = ssub.s32 %s9, 1
    $region12: #{tpu_custom_call.1} parent=5 // pred_fallthru
      _
    %p157 = scmp.lt.s32.totalorder %s9, 4
    // Predicated region
    $region13: #{tpu_custom_call.1} parent=5 // pred_check
      %p158 = pneg %p157
    $region14: #{tpu_custom_call.1} parent=5 // pred_check_branch
      %160 = sbr.rel (%p158) target = $region16
    $region15: #{tpu_custom_call.1} parent=5 // pred_region
      // Predicated region
      $region17: #{tpu_custom_call.1} parent=15 // pred_check
        %p161 = pneg %p52
      $region18: #{tpu_custom_call.1} parent=15 // pred_check_branch
        %163 = sbr.rel (%p161) target = $region20
      $region19: #{tpu_custom_call.1} parent=15 // pred_region
        %p164 = scmp.lt.s32.totalorder %s16, 1
        %s165 = scalar_select %p164, %s16, 1
        %p166 = scmp.lt.s32.totalorder %s17, 1
        %s167 = scalar_select %p166, %s17, 1
        %p168 = scmp.lt.s32.totalorder %s18, 0
        %s169 = scalar_select %p168, %s18, 0
        %s170 = sadd.s32 %s169, %s167
        %s171 = smul.addr %s165, 2
        %s172 = sadd.s32 %s170, %s171
        %s173 = smul.addr %s172, 8
        %s174 = scalar_lea.vmem %s0, %s173
      $region20: #{tpu_custom_call.1} parent=15 // pred_fallthru
        _
      // Predicated region
      $region21: #{tpu_custom_call.1} parent=15 // pred_check
        %p175 = pneg %p80
      $region22: #{tpu_custom_call.1} parent=15 // pred_check_branch
        %177 = sbr.rel (%p175) target = $region24
      $region23: #{tpu_custom_call.1} parent=15 // pred_region
        %p178 = scmp.lt.s32.totalorder %s16, 1
        %s179 = scalar_select %p178, %s16, 1
        %p180 = scmp.lt.s32.totalorder %s18, 0
        %s181 = scalar_select %p180, %s18, 0
        %s182 = sadd.s32 %s181, %s179
        %s183 = smul.addr %s182, 8
        %s184 = scalar_lea.vmem %s1, %s183
      $region24: #{tpu_custom_call.1} parent=15 // pred_fallthru
        _
      // Predicated region
      $region25: #{tpu_custom_call.1} parent=15 // pred_check
        %p185 = pneg %p108
      $region26: #{tpu_custom_call.1} parent=15 // pred_check_branch
        %187 = sbr.rel (%p185) target = $region28
      $region27: #{tpu_custom_call.1} parent=15 // pred_region
        %p188 = scmp.lt.s32.totalorder %s16, 1
        %s189 = scalar_select %p188, %s16, 1
        %p190 = scmp.lt.s32.totalorder %s18, 0
        %s191 = scalar_select %p190, %s18, 0
        %s192 = sadd.s32 %s191, %s189
        %s193 = smul.addr %s192, 8
        %s194 = scalar_lea.vmem %s2, %s193
      $region28: #{tpu_custom_call.1} parent=15 // pred_fallthru
        _
    $region16: #{tpu_custom_call.1} parent=5 // pred_fallthru
      _
    %p195 = scmp.le.s32.totalorder 1, %s9
    %p196 = scmp.lt.s32.totalorder %s9, 5
    %p197 = pnand %p195, %p196
    %p198 = pneg %p197
    // Predicated region
    $region29: #{tpu_custom_call.1} parent=5 // pred_check
      _
    $region30: #{tpu_custom_call.1} parent=5 // pred_check_branch
      %200 = sbr.rel (%p197) target = $region32
    $region31: #{tpu_custom_call.1} parent=5 // pred_region
      %s201 = ssub.s32 %s9, 1
      %p202 = scmp.lt.s32.totalorder %s19, 1
      %s203 = scalar_select %p202, %s19, 1
      %p204 = scmp.lt.s32.totalorder %s20, 1
      %s205 = scalar_select %p204, %s20, 1
      %p206 = scmp.lt.s32.totalorder %s21, 0
      %s207 = scalar_select %p206, %s21, 0
      %s208 = sadd.s32 %s207, %s205
      %s209 = smul.addr %s203, 2
      %s210 = sadd.s32 %s208, %s209
      %s211 = smul.addr %s210, 8
      %s212 = scalar_lea.vmem %s0, %s211
      %p213 = pneg %p58
      %p214 = pneg %p55
      %p215 = scmp.lt.s32.totalorder %s19, 1
      %s216 = scalar_select %p215, %s19, 1
      %p217 = scmp.lt.s32.totalorder %s21, 0
      %s218 = scalar_select %p217, %s21, 0
      %s219 = sadd.s32 %s218, %s216
      %s220 = smul.addr %s219, 8
      %s221 = scalar_lea.vmem %s1, %s220
      %p222 = pneg %p86
      %p223 = pneg %p83
      %p224 = scmp.lt.s32.totalorder %s19, 1
      %s225 = scalar_select %p224, %s19, 1
      %p226 = scmp.lt.s32.totalorder %s21, 0
      %s227 = scalar_select %p226, %s21, 0
      %s228 = sadd.s32 %s227, %s225
      %s229 = smul.addr %s228, 8
      %s230 = scalar_lea.vmem %s2, %s229
      %p231 = pneg %p114
      %p232 = pneg %p111
      %p233 = pneg %p142
      %p234 = pneg %p139
      %p235 = scmp.lt.s32.totalorder %s19, 1
      %s236 = scalar_select %p235, %s19, 1
      %p237 = scmp.lt.s32.totalorder %s20, 1
      %s238 = scalar_select %p237, %s20, 1
      %s239 = smul.addr %s236, 2
      %s240 = sadd.s32 %s238, %s239
      %s241 = scalar_lea.vmem %s3, %s240
      %p242 = scmp.lt.s32.totalorder %s19, 1
      %s243 = scalar_select %p242, %s19, 1
      %p244 = scmp.lt.s32.totalorder %s20, 1
      %s245 = scalar_select %p244, %s20, 1
      %p246 = scmp.lt.s32.totalorder %s21, 0
      %s247 = scalar_select %p246, %s21, 0
      %s248 = sadd.s32 %s247, %s245
      %s249 = smul.addr %s243, 2
      %s250 = sadd.s32 %s248, %s249
      %s251 = smul.addr %s250, 8
      %s252 = scalar_lea.vmem %s0, %s251
      %p253 = scmp.lt.s32.totalorder %s19, 1
      %s254 = scalar_select %p253, %s19, 1
      %p255 = scmp.lt.s32.totalorder %s21, 0
      %s256 = scalar_select %p255, %s21, 0
      %s257 = sadd.s32 %s256, %s254
      %s258 = smul.addr %s257, 8
      %s259 = scalar_lea.vmem %s1, %s258
      %p260 = scmp.lt.s32.totalorder %s19, 1
      %s261 = scalar_select %p260, %s19, 1
      %p262 = scmp.lt.s32.totalorder %s21, 0
      %s263 = scalar_select %p262, %s21, 0
      %s264 = sadd.s32 %s263, %s261
      %s265 = smul.addr %s264, 8
      %s266 = scalar_lea.vmem %s2, %s265
      %p267 = scmp.lt.s32.totalorder %s19, 1
      %s268 = scalar_select %p267, %s19, 1
      %p269 = scmp.lt.s32.totalorder %s20, 1
      %s270 = scalar_select %p269, %s20, 1
      %s271 = smul.addr %s268, 2
      %s272 = sadd.s32 %s270, %s271
      %s273 = scalar_lea.vmem %s3, %s272
      %p274 = scmp.eq.s32.totalorder %s21, 0
      // Predicated region
      $region33: #{tpu_custom_call.1} parent=31 // pred_check
        %p275 = pneg %p274
      $region34: #{tpu_custom_call.1} parent=31 // pred_check_branch
        %277 = sbr.rel (%p275) target = $region36
      $region35: #{tpu_custom_call.1} parent=31 // pred_region
        %vm278 = vcmask 0
        %279 = vst.msk [vmem:[%s273] sm:$0x1] %vm278, 0.0
      $region36: #{tpu_custom_call.1} parent=31 // pred_fallthru
        _
      %v280 = vld [vmem:[%s252] sm:$0xff]
      %v281 = vld [vmem:[%s259] sm:$0xff]
      %v282 = vld [vmem:[%s266] sm:$0xff]
      %v283 = vlaneseq
      %v284 = vand.u32 %v283, 127
      %vm285 = vcmask 261120
      %v286 = vsel %vm285, %v280, -inf
      %287 = vmax.xlane.f32.xlu0 %v286
      %v288 = vpop.xlane.xlu0 %287
      %289 = vset.pattern.permute.xlu0 0
      %290 = vperm.xlu0 %289, %v281
      %v291 = vpop.permute.xlu0 %290
      %vm292 = vcmp.eq.s32.totalorder %v284, %v291
      %v293 = vsel %vm292, %v280, 0.0
      %v294 = vsel %vm285, %v293, 0.0
      %295 = vadd.xlane.f32.xlu0 %v294
      %v296 = vpop.xlane.xlu0 %295
      %v297 = vsub.f32 %v280, %v288
      %v298 = vmul.f32 %v297, 1.442695
      %v299 = vpow.pop %v298
      %v300 = vsel %vm285, %v299, 0.0
      %301 = vadd.xlane.f32.xlu0 %v300
      %v302 = vpop.xlane.xlu0 %301
      %v303 = vlog2.pop %v302
      %v304 = vmul.f32 %v303, 0.6931472
      %v305 = vadd.f32 %v288, %v304
      %v306 = vsub.f32 %v305, %v296
      %v307 = vmul.f32 %v306, %v282
      %vm308 = vcmask 7168
      %v309 = vsel %vm308, %v307, 0.0
      %310 = vadd.xlane.f32.xlu0 %v309
      %v311 = vpop.xlane.xlu0 %310
      %v312 = vrot.slane %v311, 4
      %v313 = vadd.f32 %v311, %v312
      %v314 = vrot.slane %v313, 2
      %v315 = vadd.f32 %v313, %v314
      %v316 = vrot.slane %v315, 1
      %v317 = vadd.f32 %v315, %v316
      %s318 = vtos %v317
      %v319 = vld [vmem:[%s273] sm:$0x1]
      %v320 = vstv %s318
      %v321 = vadd.f32 %v319, %v320
      %vm322 = vcmask 0
      %323 = vst.msk [vmem:[%s273] sm:$0x1] %vm322, %v321
      %p324 = scmp.lt.s32.totalorder %s19, 1
      %s325 = scalar_select %p324, %s19, 1
      %p326 = scmp.lt.s32.totalorder %s20, 1
      %s327 = scalar_select %p326, %s20, 1
      %s328 = smul.addr %s325, 2
      %s329 = sadd.s32 %s327, %s328
      %s330 = scalar_lea.vmem %s3, %s329
      // Predicated region
      $region37: #{tpu_custom_call.1} parent=31 // pred_check
        %p331 = pneg %p139
      $region38: #{tpu_custom_call.1} parent=31 // pred_check_branch
        %333 = sbr.rel (%p331) target = $region40
      $region39: #{tpu_custom_call.1} parent=31 // pred_region
        _
      $region40: #{tpu_custom_call.1} parent=31 // pred_fallthru
        _
    $region32: #{tpu_custom_call.1} parent=5 // pred_fallthru
      _
    %p334 = scmp.le.s32.totalorder 2, %s9
    // Predicated region
    $region41: #{tpu_custom_call.1} parent=5 // pred_check
      %p335 = pneg %p334
    $region42: #{tpu_custom_call.1} parent=5 // pred_check_branch
      %337 = sbr.rel (%p335) target = $region44
    $region43: #{tpu_custom_call.1} parent=5 // pred_region
      %s338 = ssub.s32 %s9, 2
      // Predicated region
      $region45: #{tpu_custom_call.1} parent=43 // pred_check
        %p339 = pneg %p145
      $region46: #{tpu_custom_call.1} parent=43 // pred_check_branch
        %341 = sbr.rel (%p339) target = $region48
      $region47: #{tpu_custom_call.1} parent=43 // pred_region
        %p342 = scmp.lt.s32.totalorder %s22, 1
        %s343 = scalar_select %p342, %s22, 1
        %p344 = scmp.lt.s32.totalorder %s23, 1
        %s345 = scalar_select %p344, %s23, 1
        %s346 = smul.addr %s343, 2
        %s347 = sadd.s32 %s345, %s346
        %s348 = scalar_lea.vmem %s3, %s347
      $region48: #{tpu_custom_call.1} parent=43 // pred_fallthru
        _
    $region44: #{tpu_custom_call.1} parent=5 // pred_fallthru
      _
  $region6: #{tpu_custom_call.1} parent=0 // loop_footer
    %s13 = sadd.s32 1, %s9
  $region7: #{tpu_custom_call.1} parent=0 // loop_footer_branch
    %8 = sbr.rel target = $region3
  $region8: #{tpu_custom_call.1} parent=0 // loop_exit
    _

</llo_original>
